<compile_context>
chip_gen: v6e
topology: v6e:2x2x1
jax: 0.10.0
libtpu: 0.0.40
codegen_flags: <defaults>
</compile_context>

<pallas_src>
import functools

import jax
import jax.numpy as jnp
import numpy as np
from jax.experimental import pallas as pl
from jax.experimental.pallas import tpu as pltpu

EPS = 1e-8


def _temporal_block_kernel(x_ref, w1_ref, w2_ref, pp_ref, alphas_ref,
                           o_ref, ypad_ref, *,
                           kernel_size, dilation, padding,
                           bm, l_pad, l_true, mm_dtype):
    c_in, ncols = x_ref.shape
    c_out = w1_ref.shape[0]

    # Hoist resident loads (constant index maps keep these blocks in VMEM).
    xb = x_ref[...]                       # [C_in, bm*Lp]
    w1 = w1_ref[...]                      # [C_out, C_in]
    w2 = w2_ref[...]                      # [C_in, C_out]
    g1 = pp_ref[:, 0:1]                   # [C_out, 1]
    b1 = pp_ref[:, 1:2]
    g2 = pp_ref[:, 2:3]
    b2 = pp_ref[:, 3:4]
    dw = pp_ref[:, 4:4 + kernel_size]     # [C_out, K]
    a1 = alphas_ref[0]                    # PReLU slopes: scalars on the SMEM path
    a2 = alphas_ref[1]

    # Per-column local position inside each sample's Lp-wide segment.  Built
    # from a 2-D iota with static compares only ([1, ncols] rows, negligible).
    col = jax.lax.broadcasted_iota(jnp.int32, (1, ncols), 1)
    if bm > 1:
        seg = jnp.zeros_like(col)
        for b in range(1, bm):
            seg = seg + (col >= b * l_pad).astype(jnp.int32)
        local = col - seg * l_pad
    else:
        local = col

    def matmul(a, b):
        # Production channel counts should pass mm_dtype=bf16 (native MXU path).
        return jnp.dot(a.astype(mm_dtype), b.astype(mm_dtype),
                       preferred_element_type=jnp.float32)

    inv_n = 1.0 / float(c_out * l_true)
    n_padcols = float(c_out * (l_pad - l_true))

    def gln(v, gamma, beta):
        # Per-sample global LayerNorm over (C, L_true).  Two-pass variance.
        # The per-sample Python loop only carries scalars (no full-tensor
        # live-range growth); the apply step is one pass over the whole block.
        mus, vrs = [], []
        for b in range(bm):
            seg_v = v[:, b * l_pad:(b + 1) * l_pad]
            mu = jnp.sum(seg_v) * inv_n
            d = seg_v - mu
            q = jnp.sum(d * d)
            if l_pad > l_true:
                # lane-pad columns of v are exactly zero; remove their
                # (0 - mu)^2 contribution analytically (exact).
                q = q - n_padcols * (mu * mu)
            mus.append(mu)
            vrs.append(jnp.maximum(q * inv_n, 0.0))
        mean_row = jnp.broadcast_to(mus[0], (1, ncols)).astype(jnp.float32)
        var_row = jnp.broadcast_to(vrs[0], (1, ncols)).astype(jnp.float32)
        for b in range(1, bm):
            sel = col >= b * l_pad
            mean_row = jnp.where(sel, mus[b], mean_row)
            var_row = jnp.where(sel, vrs[b], var_row)
        istd_row = jax.lax.rsqrt(var_row + EPS)        # EUP
        return (v - mean_row) * istd_row * gamma + beta

    # ---- 1x1 conv: ONE wide MXU matmul over all bm samples, PReLU, gLN ----
    y = matmul(w1, xb)                                  # [C_out, bm*Lp]
    y = jnp.where(y >= 0.0, y, a1 * y)
    y = gln(y, g1, b1)

    # ---- depthwise conv (stride=1, dilation) ----
    # Taps read from a zero-haloed VMEM scratch; cross-sample / lane-padding
    # leakage is masked with cheap [1, ncols] compares on `local`.
    need_scratch = any(padding - k * dilation != 0 for k in range(kernel_size))
    if need_scratch:
        if padding > 0:
            zero_halo = jnp.zeros((c_out, padding), jnp.float32)
            ypad_ref[:, :padding] = zero_halo
            ypad_ref[:, padding + ncols:] = zero_halo
        ypad_ref[:, padding:padding + ncols] = y

    acc = None
    for k in range(kernel_size):
        s = padding - k * dilation
        wk = dw[:, k:k + 1]
        if s == 0:
            contrib = y * wk                            # center tap: reuse registers
        else:
            tap = ypad_ref[:, k * dilation:k * dilation + ncols]
            if bm > 1 or l_pad > l_true:
                mask = (local >= s) if s > 0 else (local < l_true + s)
                tap = jnp.where(mask, tap, 0.0)
            contrib = tap * wk
        acc = contrib if acc is None else acc + contrib

    if l_pad > l_true:
        # keep lane-pad columns at exactly zero so gLN2 stats stay exact
        acc = jnp.where(local < l_true, acc, 0.0)

    # ---- PReLU + gLN ----
    h = jnp.where(acc >= 0.0, acc, a2 * acc)
    h = gln(h, g2, b2)

    # ---- pointwise 1x1 conv (one wide MXU matmul) + residual ----
    o_ref[...] = matmul(w2, h) + xb


def temporal_block(x, params, *, kernel_size, dilation, padding,
                   batch_block=16, matmul_dtype=jnp.float32):
    """x: [M, C_in, L] float32 -> [M, C_in, L] float32 (TemporalBlock forward)."""
    M, c_in, L = x.shape
    w1 = jnp.asarray(params["w1"], jnp.float32)          # [C_out, C_in]
    w2 = jnp.asarray(params["w2"], jnp.float32)          # [C_in, C_out]
    dw = jnp.asarray(params["dw"], jnp.float32)          # [C_out, K]
    c_out = w1.shape[0]

    if dilation * (kernel_size - 1) != 2 * padding:
        raise ValueError("TemporalBlock requires a length-preserving depthwise "
                         "conv (dilation*(kernel_size-1) == 2*padding).")

    a1 = jnp.asarray(params["alpha1"], jnp.float32).reshape(-1)
    a2 = jnp.asarray(params["alpha2"], jnp.float32).reshape(-1)
    if a1.size != 1 or a2.size != 1:
        raise ValueError("Only PyTorch-default scalar PReLU (num_parameters=1) "
                         "is supported.")
    alphas = jnp.concatenate([a1, a2])                   # SMEM scalars

    # Lane padding of L -> unmasked, lane-dense output stores.
    l_pad = ((L + 127) // 128) * 128

    # VMEM budget: derive from hardware (128 MiB on v5e/v6e, 64 MiB on v7x),
    # leave headroom instead of claiming all of it.
    try:
        vmem_cap = int(pltpu.get_tpu_info().vmem_capacity_bytes)
    except Exception:
        vmem_cap = 64 * 1024 * 1024
    vmem_limit = int(max(32 * 1024 * 1024, vmem_cap - 16 * 1024 * 1024))

    # Batch block: (a) capped so there are >= 2 grid steps whenever M > 1 (the
    # "parallel" grid axis then shards across v7x's two TensorCores), (b) capped
    # by a per-sample VMEM estimate (double-buffered x/out blocks + ypad scratch
    # + ~6 live [C_out, Lp] f32 intermediates).
    per_sample = (2 * 2 * c_in + 7 * c_out) * l_pad * 4
    bm_vmem = max(1, int((vmem_limit // 2) // max(per_sample, 1)))
    bm = max(1, min(batch_block, (M + 1) // 2, bm_vmem))
    m_pad = ((M + bm - 1) // bm) * bm

    # Channels-major, lane-concatenated slab [C_in, m_pad * Lp] (zero padding of
    # both batch and lanes; zero samples stay finite through gLN and are sliced
    # off at the end).
    xp = jnp.pad(x.astype(jnp.float32),
                 ((0, m_pad - M), (0, 0), (0, l_pad - L)))
    x2d = jnp.transpose(xp, (1, 0, 2)).reshape(c_in, m_pad * l_pad)

    # Pack all tiny per-channel params into a single block (one DMA / buffer).
    packed = jnp.concatenate([
        jnp.asarray(params["gamma1"], jnp.float32).reshape(c_out, 1),
        jnp.asarray(params["beta1"], jnp.float32).reshape(c_out, 1),
        jnp.asarray(params["gamma2"], jnp.float32).reshape(c_out, 1),
        jnp.asarray(params["beta2"], jnp.float32).reshape(c_out, 1),
        dw.reshape(c_out, kernel_size),
    ], axis=1)

    kernel = functools.partial(
        _temporal_block_kernel,
        kernel_size=kernel_size, dilation=dilation, padding=padding,
        bm=bm, l_pad=l_pad, l_true=L, mm_dtype=matmul_dtype)

    ncols_blk = bm * l_pad
    const = lambda i: (0, 0)
    in_specs = [
        pl.BlockSpec((c_in, ncols_blk), lambda i: (0, i)),        # x slab block
        pl.BlockSpec((c_out, c_in), const),                       # w1 (1x1 in)
        pl.BlockSpec((c_in, c_out), const),                       # w2 (1x1 out)
        pl.BlockSpec((c_out, 4 + kernel_size), const),            # packed params
        pl.BlockSpec(memory_space=pltpu.MemorySpace.SMEM),        # PReLU alphas
    ]
    out_specs = pl.BlockSpec((c_in, ncols_blk), lambda i: (0, i))

    out = pl.pallas_call(
        kernel,
        out_shape=jax.ShapeDtypeStruct((c_in, m_pad * l_pad), jnp.float32),
        grid_spec=pltpu.PrefetchScalarGridSpec(
            num_scalar_prefetch=0,
            grid=(m_pad // bm,),
            in_specs=in_specs,
            out_specs=out_specs,
            scratch_shapes=[
                pltpu.VMEM((c_out, ncols_blk + 2 * padding), jnp.float32)],
        ),
        compiler_params=pltpu.CompilerParams(
            dimension_semantics=("parallel",),
            vmem_limit_bytes=vmem_limit,
        ),
        input_output_aliases={0: 0},      # out reuses the x slab's HBM buffer
    )(x2d, w1, w2, packed, alphas)

    out3 = out.reshape(c_in, m_pad, l_pad).transpose(1, 0, 2)
    return out3[:M, :, :L]


# ---------------- pure-JAX reference (mirrors the PyTorch module) ----------------
def temporal_block_ref(x, params, *, kernel_size, dilation, padding):
    w1, w2, dw = params["w1"], params["w2"], params["dw"]
    a1 = jnp.asarray(params["alpha1"]).reshape(-1)[0]
    a2 = jnp.asarray(params["alpha2"]).reshape(-1)[0]
    g1, b1 = params["gamma1"][None], params["beta1"][None]   # [1, C_out, 1]
    g2, b2 = params["gamma2"][None], params["beta2"][None]

    def gln(y, g, b):
        mean = jnp.mean(y, axis=(1, 2), keepdims=True)
        var = jnp.mean((y - mean) ** 2, axis=(1, 2), keepdims=True)
        return g * (y - mean) / jnp.sqrt(var + EPS) + b

    M, c_in, L = x.shape
    y = jnp.einsum("oi,bil->bol", w1, x)
    y = jnp.where(y >= 0, y, a1 * y)
    y = gln(y, g1, b1)
    yp = jnp.pad(y, ((0, 0), (0, 0), (padding, padding)))
    acc = jnp.zeros_like(y)
    for k in range(kernel_size):
        acc = acc + dw[None, :, k:k + 1] * yp[:, :, k * dilation:k * dilation + L]
    h = jnp.where(acc >= 0, acc, a2 * acc)
    h = gln(h, g2, b2)
    out = jnp.einsum("oi,bil->bol", w2, h)
    return out + x


if __name__ == "__main__":
    def run_case(M, c_in, c_out, L, ksize, dilation, seed):
        padding = (ksize - 1) * dilation // 2     # length-preserving
        key = jax.random.PRNGKey(seed)
        k_x, k_w1, k_dw, k_w2, k_g = jax.random.split(key, 5)
        x = jax.random.normal(k_x, (M, c_in, L), dtype=jnp.float32)
        gkeys = jax.random.split(k_g, 4)
        params = {
            "w1": 0.1 * jax.random.normal(k_w1, (c_out, c_in), dtype=jnp.float32),
            "alpha1": jnp.full((1, 1), 0.25, dtype=jnp.float32),   # PReLU default
            "gamma1": 1.0 + 0.1 * jax.random.normal(gkeys[0], (c_out, 1), dtype=jnp.float32),
            "beta1": 0.1 * jax.random.normal(gkeys[1], (c_out, 1), dtype=jnp.float32),
            "dw": 0.1 * jax.random.normal(k_dw, (c_out, ksize), dtype=jnp.float32),
            "alpha2": jnp.full((1, 1), 0.25, dtype=jnp.float32),
            "gamma2": 1.0 + 0.1 * jax.random.normal(gkeys[2], (c_out, 1), dtype=jnp.float32),
            "beta2": 0.1 * jax.random.normal(gkeys[3], (c_out, 1), dtype=jnp.float32),
            "w2": 0.1 * jax.random.normal(k_w2, (c_in, c_out), dtype=jnp.float32),
        }
        out = temporal_block(x, params, kernel_size=ksize, dilation=dilation,
                             padding=padding)
        out = jax.block_until_ready(out)
        ref = temporal_block_ref(x, params, kernel_size=ksize, dilation=dilation,
                                 padding=padding)
        np.testing.assert_allclose(np.asarray(out), np.asarray(ref),
                                   rtol=1e-4, atol=1e-4)

    # Multi-sample block (bm=2, grid=2): exercises the wide matmul, per-sample
    # gLN rows and cross-sample depthwise masking at a lane-aligned L.
    run_case(M=4, c_in=8, c_out=16, L=128, ksize=3, dilation=2, seed=0)
    # Non-multiple-of-128 L (lane-padding path) + odd batch (zero-sample pad).
    run_case(M=3, c_in=8, c_out=16, L=120, ksize=3, dilation=1, seed=1)
    print("KERNEL_OK")
</pallas_src>

<mosaic_0001>
module attributes {stable_mosaic.version = 11 : i64} {
  func.func @_temporal_block_kernel(%arg0: i32, %arg1: memref<8x256xf32, #tpu.memory_space<vmem>>, %arg2: memref<16x8xf32, #tpu.memory_space<vmem>>, %arg3: memref<8x16xf32, #tpu.memory_space<vmem>>, %arg4: memref<16x7xf32, #tpu.memory_space<vmem>>, %arg5: memref<2xf32, #tpu.memory_space<smem>>, %arg6: memref<8x256xf32, #tpu.memory_space<vmem>>, %arg7: memref<16x260xf32, #tpu.memory_space<vmem>>) attributes {dimension_semantics = [#tpu.dimension_semantics<parallel>], iteration_bounds = array<i64: 2>, scalar_prefetch = 0 : i64, scratch_operands = 1 : i64, tpu.core_type = #tpu.core_type<tc>, window_params = [{transform_indices = @transform_0, window_bounds = array<i64: 8, 256>}, {pipeline_mode = #tpu.pipeline_mode<synchronous>, transform_indices = @transform_1, window_bounds = array<i64: 16, 8>}, {pipeline_mode = #tpu.pipeline_mode<synchronous>, transform_indices = @transform_2, window_bounds = array<i64: 8, 16>}, {pipeline_mode = #tpu.pipeline_mode<synchronous>, transform_indices = @transform_3, window_bounds = array<i64: 16, 7>}, {transform_indices = @transform_4, window_bounds = array<i64: 2>}, {transform_indices = @transform_5, window_bounds = array<i64: 8, 256>}]} {
    %c0 = arith.constant 0 : index
    %c0_0 = arith.constant 0 : index
    %0 = vector.load %arg1[%c0, %c0_0] : memref<8x256xf32, #tpu.memory_space<vmem>>, vector<8x256xf32>
    %c0_1 = arith.constant 0 : index
    %c0_2 = arith.constant 0 : index
    %1 = vector.load %arg2[%c0_1, %c0_2] : memref<16x8xf32, #tpu.memory_space<vmem>>, vector<16x8xf32>
    %c0_3 = arith.constant 0 : index
    %c0_4 = arith.constant 0 : index
    %2 = vector.load %arg3[%c0_3, %c0_4] : memref<8x16xf32, #tpu.memory_space<vmem>>, vector<8x16xf32>
    %c0_5 = arith.constant 0 : index
    %c0_6 = arith.constant 0 : index
    %3 = vector.load %arg4[%c0_5, %c0_6] : memref<16x7xf32, #tpu.memory_space<vmem>>, vector<16x1xf32>
    %c0_7 = arith.constant 0 : index
    %c1 = arith.constant 1 : index
    %4 = vector.load %arg4[%c0_7, %c1] : memref<16x7xf32, #tpu.memory_space<vmem>>, vector<16x1xf32>
    %c0_8 = arith.constant 0 : index
    %c2 = arith.constant 2 : index
    %5 = vector.load %arg4[%c0_8, %c2] : memref<16x7xf32, #tpu.memory_space<vmem>>, vector<16x1xf32>
    %c0_9 = arith.constant 0 : index
    %c3 = arith.constant 3 : index
    %6 = vector.load %arg4[%c0_9, %c3] : memref<16x7xf32, #tpu.memory_space<vmem>>, vector<16x1xf32>
    %c0_10 = arith.constant 0 : index
    %c4 = arith.constant 4 : index
    %7 = vector.load %arg4[%c0_10, %c4] : memref<16x7xf32, #tpu.memory_space<vmem>>, vector<16x3xf32>
    %c0_11 = arith.constant 0 : index
    %8 = memref.load %arg5[%c0_11] : memref<2xf32, #tpu.memory_space<smem>>
    %c1_12 = arith.constant 1 : index
    %9 = memref.load %arg5[%c1_12] : memref<2xf32, #tpu.memory_space<smem>>
    %10 = tpu.iota {dimensions = array<i32: 1>} : vector<1x256xi32>
    %c0_i32 = arith.constant 0 : i32
    %11 = vector.broadcast %c0_i32 : i32 to vector<1x256xi32>
    %c128_i32 = arith.constant 128 : i32
    %12 = vector.broadcast %c128_i32 : i32 to vector<1x256xi32>
    %13 = arith.cmpi sge, %10, %12 : vector<1x256xi32>
    %14 = arith.extui %13 : vector<1x256xi1> to vector<1x256xi32>
    %15 = arith.addi %11, %14 : vector<1x256xi32>
    %c128_i32_13 = arith.constant 128 : i32
    %16 = vector.broadcast %c128_i32_13 : i32 to vector<1x256xi32>
    %17 = arith.muli %15, %16 : vector<1x256xi32>
    %18 = arith.subi %10, %17 : vector<1x256xi32>
    %cst = arith.constant dense<0.000000e+00> : vector<16x256xf32>
    %19 = tpu.matmul %1, %0, %cst {dimension_numbers = #tpu.dot_dimension_numbers<[1], [0], [0], [1], [0, 0, 1, 1], [], []>} : vector<16x8xf32>, vector<8x256xf32>, vector<16x256xf32> -> vector<16x256xf32>
    %cst_14 = arith.constant 0.000000e+00 : f32
    %20 = vector.broadcast %cst_14 : f32 to vector<16x256xf32>
    %21 = arith.cmpf oge, %19, %20 : vector<16x256xf32>
    %22 = vector.broadcast %8 : f32 to vector<16x256xf32>
    %23 = arith.mulf %22, %19 : vector<16x256xf32>
    %24 = arith.select %21, %19, %23 : vector<16x256xi1>, vector<16x256xf32>
    %25 = vector.extract_strided_slice %24 {offsets = [0, 0], sizes = [16, 128], strides = [1, 1]} : vector<16x256xf32> to vector<16x128xf32>
    %26 = vector.shape_cast %25 : vector<16x128xf32> to vector<1x16x128xf32>
    %cst_15 = arith.constant dense<0.000000e+00> : vector<1xf32>
    %27 = vector.multi_reduction <add>, %26, %cst_15 [1, 2] : vector<1x16x128xf32> to vector<1xf32>
    %28 = vector.shape_cast %27 : vector<1xf32> to vector<1x1x1xf32>
    %29 = vector.extract %28[0, 0, 0] : f32 from vector<1x1x1xf32>
    %cst_16 = arith.constant 4.8828125E-4 : f32
    %30 = arith.mulf %29, %cst_16 : f32
    %31 = vector.broadcast %30 : f32 to vector<16x128xf32>
    %32 = arith.subf %25, %31 : vector<16x128xf32>
    %33 = arith.mulf %32, %32 : vector<16x128xf32>
    %34 = vector.shape_cast %33 : vector<16x128xf32> to vector<1x16x128xf32>
    %cst_17 = arith.constant dense<0.000000e+00> : vector<1xf32>
    %35 = vector.multi_reduction <add>, %34, %cst_17 [1, 2] : vector<1x16x128xf32> to vector<1xf32>
    %36 = vector.shape_cast %35 : vector<1xf32> to vector<1x1x1xf32>
    %37 = vector.extract %36[0, 0, 0] : f32 from vector<1x1x1xf32>
    %cst_18 = arith.constant 4.8828125E-4 : f32
    %38 = arith.mulf %37, %cst_18 : f32
    %cst_19 = arith.constant 0.000000e+00 : f32
    %39 = arith.maximumf %38, %cst_19 : f32
    %40 = vector.extract_strided_slice %24 {offsets = [0, 128], sizes = [16, 128], strides = [1, 1]} : vector<16x256xf32> to vector<16x128xf32>
    %41 = vector.shape_cast %40 : vector<16x128xf32> to vector<1x16x128xf32>
    %cst_20 = arith.constant dense<0.000000e+00> : vector<1xf32>
    %42 = vector.multi_reduction <add>, %41, %cst_20 [1, 2] : vector<1x16x128xf32> to vector<1xf32>
    %43 = vector.shape_cast %42 : vector<1xf32> to vector<1x1x1xf32>
    %44 = vector.extract %43[0, 0, 0] : f32 from vector<1x1x1xf32>
    %cst_21 = arith.constant 4.8828125E-4 : f32
    %45 = arith.mulf %44, %cst_21 : f32
    %46 = vector.broadcast %45 : f32 to vector<16x128xf32>
    %47 = arith.subf %40, %46 : vector<16x128xf32>
    %48 = arith.mulf %47, %47 : vector<16x128xf32>
    %49 = vector.shape_cast %48 : vector<16x128xf32> to vector<1x16x128xf32>
    %cst_22 = arith.constant dense<0.000000e+00> : vector<1xf32>
    %50 = vector.multi_reduction <add>, %49, %cst_22 [1, 2] : vector<1x16x128xf32> to vector<1xf32>
    %51 = vector.shape_cast %50 : vector<1xf32> to vector<1x1x1xf32>
    %52 = vector.extract %51[0, 0, 0] : f32 from vector<1x1x1xf32>
    %cst_23 = arith.constant 4.8828125E-4 : f32
    %53 = arith.mulf %52, %cst_23 : f32
    %cst_24 = arith.constant 0.000000e+00 : f32
    %54 = arith.maximumf %53, %cst_24 : f32
    %55 = vector.broadcast %30 : f32 to vector<1x256xf32>
    %56 = vector.broadcast %39 : f32 to vector<1x256xf32>
    %c128_i32_25 = arith.constant 128 : i32
    %57 = vector.broadcast %c128_i32_25 : i32 to vector<1x256xi32>
    %58 = arith.cmpi sge, %10, %57 : vector<1x256xi32>
    %59 = vector.broadcast %45 : f32 to vector<1x256xf32>
    %60 = arith.select %58, %59, %55 : vector<1x256xi1>, vector<1x256xf32>
    %61 = vector.broadcast %54 : f32 to vector<1x256xf32>
    %62 = arith.select %58, %61, %56 : vector<1x256xi1>, vector<1x256xf32>
    %cst_26 = arith.constant 9.99999993E-9 : f32
    %63 = vector.broadcast %cst_26 : f32 to vector<1x256xf32>
    %64 = arith.addf %62, %63 : vector<1x256xf32>
    %65 = math.rsqrt %64 : vector<1x256xf32>
    %66 = vector.broadcast %60 : vector<1x256xf32> to vector<16x256xf32>
    %67 = arith.subf %24, %66 : vector<16x256xf32>
    %68 = vector.broadcast %65 : vector<1x256xf32> to vector<16x256xf32>
    %69 = arith.mulf %67, %68 : vector<16x256xf32>
    %70 = vector.broadcast %3 : vector<16x1xf32> to vector<16x256xf32>
    %71 = arith.mulf %69, %70 : vector<16x256xf32>
    %72 = vector.broadcast %4 : vector<16x1xf32> to vector<16x256xf32>
    %73 = arith.addf %71, %72 : vector<16x256xf32>
    %cst_27 = arith.constant 0.000000e+00 : f32
    %74 = vector.broadcast %cst_27 : f32 to vector<16x2xf32>
    %c0_28 = arith.constant 0 : index
    %c0_29 = arith.constant 0 : index
    %75 = vector.load %arg7[%c0_28, %c0_29] : memref<16x260xf32, #tpu.memory_space<vmem>>, vector<16x2xf32>
    tpu.vector_store %arg7[%c0_28, %c0_29], %74 {strides = array<i32>} : memref<16x260xf32, #tpu.memory_space<vmem>>, vector<16x2xf32>,
    %c0_30 = arith.constant 0 : index
    %c258 = arith.constant 258 : index
    %76 = vector.load %arg7[%c0_30, %c258] : memref<16x260xf32, #tpu.memory_space<vmem>>, vector<16x2xf32>
    tpu.vector_store %arg7[%c0_30, %c258], %74 {strides = array<i32>} : memref<16x260xf32, #tpu.memory_space<vmem>>, vector<16x2xf32>,
    %c0_31 = arith.constant 0 : index
    %c2_32 = arith.constant 2 : index
    %77 = vector.load %arg7[%c0_31, %c2_32] : memref<16x260xf32, #tpu.memory_space<vmem>>, vector<16x256xf32>
    tpu.vector_store %arg7[%c0_31, %c2_32], %73 {strides = array<i32>} : memref<16x260xf32, #tpu.memory_space<vmem>>, vector<16x256xf32>,
    %78 = vector.extract_strided_slice %7 {offsets = [0, 0], sizes = [16, 1], strides = [1, 1]} : vector<16x3xf32> to vector<16x1xf32>
    %c0_33 = arith.constant 0 : index
    %c0_34 = arith.constant 0 : index
    %79 = vector.load %arg7[%c0_33, %c0_34] : memref<16x260xf32, #tpu.memory_space<vmem>>, vector<16x256xf32>
    %c2_i32 = arith.constant 2 : i32
    %80 = vector.broadcast %c2_i32 : i32 to vector<1x256xi32>
    %81 = arith.cmpi sge, %18, %80 : vector<1x256xi32>
    %cst_35 = arith.constant 0.000000e+00 : f32
    %82 = vector.shape_cast %81 : vector<1x256xi1> to vector<1x256xi1>
    %83 = vector.broadcast %82 : vector<1x256xi1> to vector<16x256xi1>
    %84 = vector.broadcast %cst_35 : f32 to vector<16x256xf32>
    %85 = arith.select %83, %79, %84 : vector<16x256xi1>, vector<16x256xf32>
    %86 = vector.broadcast %78 : vector<16x1xf32> to vector<16x256xf32>
    %87 = arith.mulf %85, %86 : vector<16x256xf32>
    %88 = vector.extract_strided_slice %7 {offsets = [0, 1], sizes = [16, 1], strides = [1, 1]} : vector<16x3xf32> to vector<16x1xf32>
    %89 = vector.broadcast %88 : vector<16x1xf32> to vector<16x256xf32>
    %90 = arith.mulf %73, %89 : vector<16x256xf32>
    %91 = arith.addf %87, %90 : vector<16x256xf32>
    %92 = vector.extract_strided_slice %7 {offsets = [0, 2], sizes = [16, 1], strides = [1, 1]} : vector<16x3xf32> to vector<16x1xf32>
    %c0_36 = arith.constant 0 : index
    %c4_37 = arith.constant 4 : index
    %93 = vector.load %arg7[%c0_36, %c4_37] : memref<16x260xf32, #tpu.memory_space<vmem>>, vector<16x256xf32>
    %c126_i32 = arith.constant 126 : i32
    %94 = vector.broadcast %c126_i32 : i32 to vector<1x256xi32>
    %95 = arith.cmpi slt, %18, %94 : vector<1x256xi32>
    %cst_38 = arith.constant 0.000000e+00 : f32
    %96 = vector.shape_cast %95 : vector<1x256xi1> to vector<1x256xi1>
    %97 = vector.broadcast %96 : vector<1x256xi1> to vector<16x256xi1>
    %98 = vector.broadcast %cst_38 : f32 to vector<16x256xf32>
    %99 = arith.select %97, %93, %98 : vector<16x256xi1>, vector<16x256xf32>
    %100 = vector.broadcast %92 : vector<16x1xf32> to vector<16x256xf32>
    %101 = arith.mulf %99, %100 : vector<16x256xf32>
    %102 = arith.addf %91, %101 : vector<16x256xf32>
    %cst_39 = arith.constant 0.000000e+00 : f32
    %103 = vector.broadcast %cst_39 : f32 to vector<16x256xf32>
    %104 = arith.cmpf oge, %102, %103 : vector<16x256xf32>
    %105 = vector.broadcast %9 : f32 to vector<16x256xf32>
    %106 = arith.mulf %105, %102 : vector<16x256xf32>
    %107 = arith.select %104, %102, %106 : vector<16x256xi1>, vector<16x256xf32>
    %108 = vector.extract_strided_slice %107 {offsets = [0, 0], sizes = [16, 128], strides = [1, 1]} : vector<16x256xf32> to vector<16x128xf32>
    %109 = vector.shape_cast %108 : vector<16x128xf32> to vector<1x16x128xf32>
    %cst_40 = arith.constant dense<0.000000e+00> : vector<1xf32>
    %110 = vector.multi_reduction <add>, %109, %cst_40 [1, 2] : vector<1x16x128xf32> to vector<1xf32>
    %111 = vector.shape_cast %110 : vector<1xf32> to vector<1x1x1xf32>
    %112 = vector.extract %111[0, 0, 0] : f32 from vector<1x1x1xf32>
    %cst_41 = arith.constant 4.8828125E-4 : f32
    %113 = arith.mulf %112, %cst_41 : f32
    %114 = vector.broadcast %113 : f32 to vector<16x128xf32>
    %115 = arith.subf %108, %114 : vector<16x128xf32>
    %116 = arith.mulf %115, %115 : vector<16x128xf32>
    %117 = vector.shape_cast %116 : vector<16x128xf32> to vector<1x16x128xf32>
    %cst_42 = arith.constant dense<0.000000e+00> : vector<1xf32>
    %118 = vector.multi_reduction <add>, %117, %cst_42 [1, 2] : vector<1x16x128xf32> to vector<1xf32>
    %119 = vector.shape_cast %118 : vector<1xf32> to vector<1x1x1xf32>
    %120 = vector.extract %119[0, 0, 0] : f32 from vector<1x1x1xf32>
    %cst_43 = arith.constant 4.8828125E-4 : f32
    %121 = arith.mulf %120, %cst_43 : f32
    %cst_44 = arith.constant 0.000000e+00 : f32
    %122 = arith.maximumf %121, %cst_44 : f32
    %123 = vector.extract_strided_slice %107 {offsets = [0, 128], sizes = [16, 128], strides = [1, 1]} : vector<16x256xf32> to vector<16x128xf32>
    %124 = vector.shape_cast %123 : vector<16x128xf32> to vector<1x16x128xf32>
    %cst_45 = arith.constant dense<0.000000e+00> : vector<1xf32>
    %125 = vector.multi_reduction <add>, %124, %cst_45 [1, 2] : vector<1x16x128xf32> to vector<1xf32>
    %126 = vector.shape_cast %125 : vector<1xf32> to vector<1x1x1xf32>
    %127 = vector.extract %126[0, 0, 0] : f32 from vector<1x1x1xf32>
    %cst_46 = arith.constant 4.8828125E-4 : f32
    %128 = arith.mulf %127, %cst_46 : f32
    %129 = vector.broadcast %128 : f32 to vector<16x128xf32>
    %130 = arith.subf %123, %129 : vector<16x128xf32>
    %131 = arith.mulf %130, %130 : vector<16x128xf32>
    %132 = vector.shape_cast %131 : vector<16x128xf32> to vector<1x16x128xf32>
    %cst_47 = arith.constant dense<0.000000e+00> : vector<1xf32>
    %133 = vector.multi_reduction <add>, %132, %cst_47 [1, 2] : vector<1x16x128xf32> to vector<1xf32>
    %134 = vector.shape_cast %133 : vector<1xf32> to vector<1x1x1xf32>
    %135 = vector.extract %134[0, 0, 0] : f32 from vector<1x1x1xf32>
    %cst_48 = arith.constant 4.8828125E-4 : f32
    %136 = arith.mulf %135, %cst_48 : f32
    %cst_49 = arith.constant 0.000000e+00 : f32
    %137 = arith.maximumf %136, %cst_49 : f32
    %138 = vector.broadcast %113 : f32 to vector<1x256xf32>
    %139 = vector.broadcast %122 : f32 to vector<1x256xf32>
    %c128_i32_50 = arith.constant 128 : i32
    %140 = vector.broadcast %c128_i32_50 : i32 to vector<1x256xi32>
    %141 = arith.cmpi sge, %10, %140 : vector<1x256xi32>
    %142 = vector.broadcast %128 : f32 to vector<1x256xf32>
    %143 = arith.select %141, %142, %138 : vector<1x256xi1>, vector<1x256xf32>
    %144 = vector.broadcast %137 : f32 to vector<1x256xf32>
    %145 = arith.select %141, %144, %139 : vector<1x256xi1>, vector<1x256xf32>
    %cst_51 = arith.constant 9.99999993E-9 : f32
    %146 = vector.broadcast %cst_51 : f32 to vector<1x256xf32>
    %147 = arith.addf %145, %146 : vector<1x256xf32>
    %148 = math.rsqrt %147 : vector<1x256xf32>
    %149 = vector.broadcast %143 : vector<1x256xf32> to vector<16x256xf32>
    %150 = arith.subf %107, %149 : vector<16x256xf32>
    %151 = vector.broadcast %148 : vector<1x256xf32> to vector<16x256xf32>
    %152 = arith.mulf %150, %151 : vector<16x256xf32>
    %153 = vector.broadcast %5 : vector<16x1xf32> to vector<16x256xf32>
    %154 = arith.mulf %152, %153 : vector<16x256xf32>
    %155 = vector.broadcast %6 : vector<16x1xf32> to vector<16x256xf32>
    %156 = arith.addf %154, %155 : vector<16x256xf32>
    %cst_52 = arith.constant dense<0.000000e+00> : vector<8x256xf32>
    %157 = tpu.matmul %2, %156, %cst_52 {dimension_numbers = #tpu.dot_dimension_numbers<[1], [0], [0], [1], [0, 0, 1, 1], [], []>} : vector<8x16xf32>, vector<16x256xf32>, vector<8x256xf32> -> vector<8x256xf32>
    %158 = arith.addf %157, %0 : vector<8x256xf32>
    %c0_53 = arith.constant 0 : index
    %c0_54 = arith.constant 0 : index
    %159 = vector.load %arg6[%c0_53, %c0_54] : memref<8x256xf32, #tpu.memory_space<vmem>>, vector<8x256xf32>
    tpu.vector_store %arg6[%c0_53, %c0_54], %158 {strides = array<i32>} : memref<8x256xf32, #tpu.memory_space<vmem>>, vector<8x256xf32>,
    return
  }
  func.func @transform_0(%arg0: i32) -> (i32, i32) {
    %c0_i32 = arith.constant 0 : i32
    %c0_i32_0 = arith.constant 0 : i32
    return %c0_i32, %arg0 : i32, i32
  }
  func.func @transform_1(%arg0: i32) -> (i32, i32) {
    %c0_i32 = arith.constant 0 : i32
    %c0_i32_0 = arith.constant 0 : i32
    %c0_i32_1 = arith.constant 0 : i32
    return %c0_i32, %c0_i32_0 : i32, i32
  }
  func.func @transform_2(%arg0: i32) -> (i32, i32) {
    %c0_i32 = arith.constant 0 : i32
    %c0_i32_0 = arith.constant 0 : i32
    %c0_i32_1 = arith.constant 0 : i32
    return %c0_i32, %c0_i32_0 : i32, i32
  }
  func.func @transform_3(%arg0: i32) -> (i32, i32) {
    %c0_i32 = arith.constant 0 : i32
    %c0_i32_0 = arith.constant 0 : i32
    %c0_i32_1 = arith.constant 0 : i32
    return %c0_i32, %c0_i32_0 : i32, i32
  }
  func.func @transform_4(%arg0: i32) -> i32 {
    %c0_i32 = arith.constant 0 : i32
    %c0_i32_0 = arith.constant 0 : i32
    return %c0_i32 : i32
  }
  func.func @transform_5(%arg0: i32) -> (i32, i32) {
    %c0_i32 = arith.constant 0 : i32
    %c0_i32_0 = arith.constant 0 : i32
    return %c0_i32, %arg0 : i32, i32
  }
}

</mosaic_0001>

<llo_original>
// kernel: tpu_custom_call.1
$region0: #{tpu_custom_call.1}
  #allocation0 [shape = 'u32[]', space=smem, size = 0x4, offset = 0x4, fixed_abs, tag = 'smem constant byte address 0x4 - core index']
  #allocation1 [shape = 'u32[144,128]{1,0:T(1,128)}', space=vmem, size = 0x12000, scoped, tag = 'internal scratch']
  #allocation2 [shape = 'f32[16,260]{1,0:T(8,128)}', space=vmem, size = 0x6000, scoped, tag = 'scratch operand']
  %s0 = inlined_call_operand.hbm [shape: f32[8,512], index: 0, kind: input, shape index: {}, may-alias: {0,5}]
  %s1 = inlined_call_operand.vmem [shape: f32[16,8], index: 1, kind: input, shape index: {}]
  %s2 = inlined_call_operand.vmem [shape: f32[8,16], index: 2, kind: input, shape index: {}]
  %s3 = inlined_call_operand.vmem [shape: f32[16,7], index: 3, kind: input, shape index: {}]
  %s4 = inlined_call_operand.vmem [shape: f32[2], index: 4, kind: input, shape index: {}]
  %s5 = inlined_call_operand.hbm [shape: f32[8,512], index: 5, kind: output, shape index: {}, may-alias: {0,5}]
  %s6 = sld [smem:[#allocation0]]
  $region61: #{tpu_custom_call.1} parent=0
    _
  %s8 = ssub.s32 1, %s6
  %s9 = scalar_select 0, %s8, %s6
  $region1: #{tpu_custom_call.1} parent=0
    #allocation3 [shape = 'u8[16384]{0}', space=vmem, size = 0x4000, scoped, tag = 'input window, operand 0']
    #allocation4 [shape = 's32[2]{0}', space=sflag, size = 0x8, scoped, tag = 'scoped memory for tpu_custom_call.1']
    #allocation5 [shape = 's32[2]{0}', space=sflag, size = 0x8, scoped, tag = 'scoped memory for tpu_custom_call.1']
    #allocation6 [shape = 's32[2]{0}', space=sflag, size = 0x8, scoped, tag = 'scoped memory for tpu_custom_call.1']
    #allocation7 [shape = 'u8[512]{0}', space=smem, size = 0x200, scoped, tag = 'input window, operand 4, single buffered']
    #allocation8 [shape = 'u8[16384]{0}', space=vmem, size = 0x4000, scoped, tag = 'output window, operand 0']
    %10 = vsyncpa [#allocation4], 0
    %s11 = scalar_lea.sflag [#allocation4], 1
    %12 = vsyncpa %s11, 0
    %13 = vsyncpa [#allocation6], 0
    %14 = vsyncpa [#allocation5], 0
    %s15 = scalar_lea.sflag [#allocation5], 1
    %16 = vsyncpa %s15, 0
    loop: start=0, step=1, limit=4
    $region2: #{tpu_custom_call.1} parent=1 // loop_pre_header
      _
    $region3: #{tpu_custom_call.1} parent=1 // loop_header
      %s18 = sphi 0, %s22
      %p19 = scmp.ge.s32.totalorder %s18, 4
      %s28 = sphi 0, %s30
      %s31 = sphi 0, %s28
      %s32 = sphi 0, %s31
      %s48 = sphi 0, %s32
      %s52 = sphi 0, %s52
      %s54 = sphi 0, %s52
      %s55 = sphi 0, %s54
      %s69 = sphi 0, %s55
      %s73 = sphi 0, %s73
      %s75 = sphi 0, %s73
      %s76 = sphi 0, %s75
      %s90 = sphi 0, %s76
      %s94 = sphi 0, %s94
      %s96 = sphi 0, %s94
      %s97 = sphi 0, %s96
      %s111 = sphi 0, %s97
      %s115 = sphi 0, %s115
      %s117 = sphi 0, %s115
      %s118 = sphi 0, %s117
      %s132 = sphi 0, %s118
      %s138 = sphi 0, %s140
      %s141 = sphi 0, %s138
      %s142 = sphi 0, %s141
      %s158 = sphi 0, %s142
    $region4: #{tpu_custom_call.1} parent=1 // loop_header_branch
      %21 = sbr.rel (%p19) target = $region8
    $region5: #{tpu_custom_call.1} parent=1 // loop_body
      %s23 = ssub.s32 %s18, 1
      %s24 = ssub.s32 %s18, 2
      %s25 = sadd.s32 %s18, 1
      %s26 = ssub.s32 %s18, %s25
      %p27 = scmp.eq.s32.totalorder %s26, 0
      %s29 = sadd.s32 %s28, 1
      %s30 = scalar_select %p27, %s28, %s29
      %p33 = pneg %p27
      %p34 = scmp.eq.s32.totalorder %s18, 1
      %p35 = por %p33, %p34
      %p36 = scmp.ne.s32.totalorder %s28, %s31
      %p37 = scmp.eq.s32.totalorder %s18, 0
      %p38 = por %p36, %p37
      %p39 = scmp.ne.s32.totalorder %s28, %s31
      %p40 = scmp.eq.s32.totalorder %s23, 1
      %p41 = por %p39, %p40
      %p42 = scmp.ne.s32.totalorder %s31, %s32
      %p43 = scmp.eq.s32.totalorder %s23, 0
      %p44 = por %p42, %p43
      %p45 = scmp.ne.s32.totalorder %s31, %s32
      %p46 = scmp.eq.s32.totalorder %s24, 1
      %p47 = por %p45, %p46
      %p49 = scmp.ne.s32.totalorder %s32, %s48
      %p50 = scmp.eq.s32.totalorder %s24, 0
      %p51 = por %p49, %p50
      %s53 = sadd.s32 %s52, 1
      %p56 = scmp.eq.s32.totalorder %s18, 1
      %p57 = scmp.ne.s32.totalorder %s52, %s54
      %p58 = scmp.eq.s32.totalorder %s18, 0
      %p59 = por %p57, %p58
      %p60 = scmp.ne.s32.totalorder %s52, %s54
      %p61 = scmp.eq.s32.totalorder %s23, 1
      %p62 = por %p60, %p61
      %p63 = scmp.ne.s32.totalorder %s54, %s55
      %p64 = scmp.eq.s32.totalorder %s23, 0
      %p65 = por %p63, %p64
      %p66 = scmp.ne.s32.totalorder %s54, %s55
      %p67 = scmp.eq.s32.totalorder %s24, 1
      %p68 = por %p66, %p67
      %p70 = scmp.ne.s32.totalorder %s55, %s69
      %p71 = scmp.eq.s32.totalorder %s24, 0
      %p72 = por %p70, %p71
      %s74 = sadd.s32 %s73, 1
      %p77 = scmp.eq.s32.totalorder %s18, 1
      %p78 = scmp.ne.s32.totalorder %s73, %s75
      %p79 = scmp.eq.s32.totalorder %s18, 0
      %p80 = por %p78, %p79
      %p81 = scmp.ne.s32.totalorder %s73, %s75
      %p82 = scmp.eq.s32.totalorder %s23, 1
      %p83 = por %p81, %p82
      %p84 = scmp.ne.s32.totalorder %s75, %s76
      %p85 = scmp.eq.s32.totalorder %s23, 0
      %p86 = por %p84, %p85
      %p87 = scmp.ne.s32.totalorder %s75, %s76
      %p88 = scmp.eq.s32.totalorder %s24, 1
      %p89 = por %p87, %p88
      %p91 = scmp.ne.s32.totalorder %s76, %s90
      %p92 = scmp.eq.s32.totalorder %s24, 0
      %p93 = por %p91, %p92
      %s95 = sadd.s32 %s94, 1
      %p98 = scmp.eq.s32.totalorder %s18, 1
      %p99 = scmp.ne.s32.totalorder %s94, %s96
      %p100 = scmp.eq.s32.totalorder %s18, 0
      %p101 = por %p99, %p100
      %p102 = scmp.ne.s32.totalorder %s94, %s96
      %p103 = scmp.eq.s32.totalorder %s23, 1
      %p104 = por %p102, %p103
      %p105 = scmp.ne.s32.totalorder %s96, %s97
      %p106 = scmp.eq.s32.totalorder %s23, 0
      %p107 = por %p105, %p106
      %p108 = scmp.ne.s32.totalorder %s96, %s97
      %p109 = scmp.eq.s32.totalorder %s24, 1
      %p110 = por %p108, %p109
      %p112 = scmp.ne.s32.totalorder %s97, %s111
      %p113 = scmp.eq.s32.totalorder %s24, 0
      %p114 = por %p112, %p113
      %s116 = sadd.s32 %s115, 1
      %p119 = scmp.eq.s32.totalorder %s18, 1
      %p120 = scmp.ne.s32.totalorder %s115, %s117
      %p121 = scmp.eq.s32.totalorder %s18, 0
      %p122 = por %p120, %p121
      %p123 = scmp.ne.s32.totalorder %s115, %s117
      %p124 = scmp.eq.s32.totalorder %s23, 1
      %p125 = por %p123, %p124
      %p126 = scmp.ne.s32.totalorder %s117, %s118
      %p127 = scmp.eq.s32.totalorder %s23, 0
      %p128 = por %p126, %p127
      %p129 = scmp.ne.s32.totalorder %s117, %s118
      %p130 = scmp.eq.s32.totalorder %s24, 1
      %p131 = por %p129, %p130
      %p133 = scmp.ne.s32.totalorder %s118, %s132
      %p134 = scmp.eq.s32.totalorder %s24, 0
      %p135 = por %p133, %p134
      %s136 = ssub.s32 %s18, %s25
      %p137 = scmp.eq.s32.totalorder %s136, 0
      %s139 = sadd.s32 %s138, 1
      %s140 = scalar_select %p137, %s138, %s139
      %p143 = pneg %p137
      %p144 = scmp.eq.s32.totalorder %s18, 1
      %p145 = por %p143, %p144
      %p146 = scmp.ne.s32.totalorder %s138, %s141
      %p147 = scmp.eq.s32.totalorder %s18, 0
      %p148 = por %p146, %p147
      %p149 = scmp.ne.s32.totalorder %s138, %s141
      %p150 = scmp.eq.s32.totalorder %s23, 1
      %p151 = por %p149, %p150
      %p152 = scmp.ne.s32.totalorder %s141, %s142
      %p153 = scmp.eq.s32.totalorder %s23, 0
      %p154 = por %p152, %p153
      %p155 = scmp.ne.s32.totalorder %s141, %s142
      %p156 = scmp.eq.s32.totalorder %s24, 1
      %p157 = por %p155, %p156
      %p159 = scmp.ne.s32.totalorder %s142, %s158
      %p160 = scmp.eq.s32.totalorder %s24, 0
      %p161 = por %p159, %p160
      %p162 = scmp.le.s32.totalorder 1, %s18
      %p163 = scmp.lt.s32.totalorder %s18, 3
      %p164 = pnand %p162, %p163
      %p165 = pneg %p164
      // Predicated region
      $region9: #{tpu_custom_call.1} parent=5 // pred_check
        _
      $region10: #{tpu_custom_call.1} parent=5 // pred_check_branch
        %167 = sbr.rel (%p164) target = $region12
      $region11: #{tpu_custom_call.1} parent=5 // pred_region
        %s168 = ssub.s32 %s18, 1
        // Predicated region
        $region13: #{tpu_custom_call.1} parent=11 // pred_check
          %p169 = pneg %p65
        $region14: #{tpu_custom_call.1} parent=11 // pred_check_branch
          %171 = sbr.rel (%p169) target = $region16
        $region15: #{tpu_custom_call.1} parent=11 // pred_region
          _
        $region16: #{tpu_custom_call.1} parent=11 // pred_fallthru
          _
        // Predicated region
        $region17: #{tpu_custom_call.1} parent=11 // pred_check
          %p172 = pneg %p86
        $region18: #{tpu_custom_call.1} parent=11 // pred_check_branch
          %174 = sbr.rel (%p172) target = $region20
        $region19: #{tpu_custom_call.1} parent=11 // pred_region
          _
        $region20: #{tpu_custom_call.1} parent=11 // pred_fallthru
          _
        // Predicated region
        $region21: #{tpu_custom_call.1} parent=11 // pred_check
          %p175 = pneg %p107
        $region22: #{tpu_custom_call.1} parent=11 // pred_check_branch
          %177 = sbr.rel (%p175) target = $region24
        $region23: #{tpu_custom_call.1} parent=11 // pred_region
          _
        $region24: #{tpu_custom_call.1} parent=11 // pred_fallthru
          _
        // Predicated region
        $region25: #{tpu_custom_call.1} parent=11 // pred_check
          %p178 = pneg %p128
        $region26: #{tpu_custom_call.1} parent=11 // pred_check_branch
          %180 = sbr.rel (%p178) target = $region28
        $region27: #{tpu_custom_call.1} parent=11 // pred_region
          %s182 = ssub.s32 16, 16
          %183 = vsyncadd [#allocation6], %s182
          %s185 = sshll.u32 %s4, 4
          %s186 = int_to_ptr.vmem [resolvable:$true] %s185
          %188 = dma.vmem_to_smem %s186, 16, [#allocation7], [#allocation6]
        $region28: #{tpu_custom_call.1} parent=11 // pred_fallthru
          _
      $region12: #{tpu_custom_call.1} parent=5 // pred_fallthru
        _
      %p189 = scmp.lt.s32.totalorder %s18, 2
      // Predicated region
      $region29: #{tpu_custom_call.1} parent=5 // pred_check
        %p190 = pneg %p189
      $region30: #{tpu_custom_call.1} parent=5 // pred_check_branch
        %192 = sbr.rel (%p190) target = $region32
      $region31: #{tpu_custom_call.1} parent=5 // pred_region
        // Predicated region
        $region33: #{tpu_custom_call.1} parent=31 // pred_check
          %p193 = pneg %p38
        $region34: #{tpu_custom_call.1} parent=31 // pred_check_branch
          %195 = sbr.rel (%p193) target = $region36
        $region35: #{tpu_custom_call.1} parent=31 // pred_region
          %s196 = sand.u32 %s28, 1
          %s197 = scalar_lea.sflag [#allocation4], %s196
          %s198 = sand.u32 %s28, 1
          %s199 = smul.addr %s198, 16
          %s200 = scalar_lea.vmem [#allocation3], %s199
          %s201 = smul.u32 2, %s18
          %s203 = ssub.s32 256, 256
          %204 = vsyncadd %s197, %s203
          %s205 = smul.addr %s201, 128
          %s206 = scalar_lea.hbm %s0, %s205
          %s208 = sshll.u32 %s200, 4
          %s209 = int_to_ptr.vmem [resolvable:$true] %s208
          %211 = dma.hbm_to_vmem [thread:$0]  %s206, 256, %s209, %s197
        $region36: #{tpu_custom_call.1} parent=31 // pred_fallthru
          _
      $region32: #{tpu_custom_call.1} parent=5 // pred_fallthru
        _
      %p212 = scmp.le.s32.totalorder 1, %s18
      %p213 = scmp.lt.s32.totalorder %s18, 3
      %p214 = pnand %p212, %p213
      %p215 = pneg %p214
      // Predicated region
      $region37: #{tpu_custom_call.1} parent=5 // pred_check
        _
      $region38: #{tpu_custom_call.1} parent=5 // pred_check_branch
        %217 = sbr.rel (%p214) target = $region40
      $region39: #{tpu_custom_call.1} parent=5 // pred_region
        %s218 = ssub.s32 %s18, 1
        %s219 = sand.u32 %s31, 1
        %s220 = scalar_lea.sflag [#allocation4], %s219
        %s221 = sand.u32 %s31, 1
        %s222 = smul.addr %s221, 16
        %s223 = scalar_lea.vmem [#allocation3], %s222
        // Predicated region
        $region41: #{tpu_custom_call.1} parent=39 // pred_check
          %p224 = pneg %p44
        $region42: #{tpu_custom_call.1} parent=39 // pred_check_branch
          %226 = sbr.rel (%p224) target = $region44
        $region43: #{tpu_custom_call.1} parent=39 // pred_region
          %227 = dma.done %s220, 256
        $region44: #{tpu_custom_call.1} parent=39 // pred_fallthru
          _
        // Predicated region
        $region45: #{tpu_custom_call.1} parent=39 // pred_check
          %p228 = pneg %p128
        $region46: #{tpu_custom_call.1} parent=39 // pred_check_branch
          %230 = sbr.rel (%p228) target = $region48
        $region47: #{tpu_custom_call.1} parent=39 // pred_region
          %231 = dma.done [#allocation6], 16
        $region48: #{tpu_custom_call.1} parent=39 // pred_fallthru
          _
        %232 = sfence
        %s233 = sand.u32 %s31, 1
        %s234 = scalar_lea.sflag [#allocation4], %s233
        %s235 = sand.u32 %s31, 1
        %s236 = smul.addr %s235, 16
        %s237 = scalar_lea.vmem [#allocation3], %s236
        %p238 = pneg %p44
        %p239 = pneg %p41
        %p240 = pneg %p65
        %p241 = pneg %p62
        %p242 = pneg %p86
        %p243 = pneg %p83
        %p244 = pneg %p107
        %p245 = pneg %p104
        %p246 = pneg %p128
        %p247 = pneg %p125
        %p248 = pneg %p154
        %p249 = pneg %p151
        %s250 = sand.u32 %s141, 1
        %s251 = scalar_lea.sflag [#allocation5], %s250
        %s252 = sand.u32 %s141, 1
        %s253 = smul.addr %s252, 16
        %s254 = scalar_lea.vmem [#allocation8], %s253
        %s255 = smul.u32 2, %s23
        %s256 = smul.u32 2, %s23
        %v257 = vld [vmem:[%s223] sm:$0xff]
        %v258 = vld [vmem:[%s223 + $0x8] sm:$0xff]
        %v259 = vld [vmem:[%s1] sm:$0xff]
        %v260 = vld [vmem:[%s1 + $0x8] sm:$0xff]
        %v261 = vld [vmem:[%s2] sm:$0xff]
        %v262 = vld [vmem:[%s3] sm:$0xff]
        %v263 = vld [vmem:[%s3 + $0x8] sm:$0xff]
        %s264 = sld [smem:[#allocation7]]
        %s265 = sld [smem:[#allocation7 + $0x1]]
        %v266 = vlaneseq
        %v267 = vand.u32 %v266, 127
        %v268 = vadd.s32 %v267, 128
        %vm269 = vcmp.ge.s32.totalorder %v267, 128
        %vm270 = vcmp.ge.s32.totalorder %v268, 128
        %v271 = vsel %vm269, 1, 0
        %v272 = vsel %vm270, 1, 0
        %v273 = vmul.u32 %v271, 128
        %v274 = vmul.u32 %v272, 128
        %v275 = vsub.s32 %v267, %v273
        %v276 = vsub.s32 %v268, %v274
        %vm277 = vcmask 64512
        %v279 = vsel %vm277, %v259, 0
        %v282 = vsel %vm277, %v260, 0
        %284 = vmatprep.subr.mxu0 0.0
        %285 = vmatpush1.msra.mxu0 0.0
        %286 = vmatprep.subr.mxu0 0.0
        %287 = vmatpush1.msra.mxu0 0.0
        %288 = vmatprep.subr.mxu0 0.0
        %289 = vmatpush1.msra.mxu0 0.0
        %290 = vmatprep.subr.mxu0 0.0
        %291 = vmatpush1.msra.mxu0 0.0
        %292 = vmatprep.subr.mxu0 0.0
        %293 = vmatpush1.msra.mxu0 0.0
        %294 = vmatprep.subr.mxu0 0.0
        %295 = vmatpush1.msra.mxu0 0.0
        %296 = vmatprep.subr.mxu0 0.0
        %297 = vmatpush1.msra.mxu0 0.0
        %298 = vmatprep.subr.mxu0 0.0
        %299 = vmatpush1.msra.mxu0 0.0
        %300 = vmatprep.subr.mxu0 0.0
        %301 = vmatpush1.msra.mxu0 0.0
        %302 = vmatprep.subr.mxu0 0.0
        %303 = vmatpush1.msra.mxu0 0.0
        %304 = vmatprep.subr.mxu0 0.0
        %305 = vmatpush1.msra.mxu0 0.0
        %306 = vmatprep.subr.mxu0 0.0
        %307 = vmatpush1.msra.mxu0 0.0
        %308 = vmatprep.subr.mxu0 0.0
        %309 = vmatpush1.msra.mxu0 0.0
        %310 = vmatprep.subr.mxu0 0.0
        %311 = vmatpush1.msra.mxu0 0.0
        %312 = vmatprep.subr.mxu0 0.0
        %313 = vmatpush1.msra.mxu0 0.0
        %314 = vmatprep.subr.mxu0 %v258
        %315 = vmatpush1.msra.mxu0 %v257
        %316 = vmatprep.subr.mxu0 0.0
        %317 = vmatpush2.msra.mxu0 0.0
        %318 = vmatprep.subr.mxu0 0.0
        %319 = vmatpush2.msra.mxu0 0.0
        %320 = vmatprep.subr.mxu0 0.0
        %321 = vmatpush2.msra.mxu0 0.0
        %322 = vmatprep.subr.mxu0 0.0
        %323 = vmatpush2.msra.mxu0 0.0
        %324 = vmatprep.subr.mxu0 0.0
        %325 = vmatpush2.msra.mxu0 0.0
        %326 = vmatprep.subr.mxu0 0.0
        %327 = vmatpush2.msra.mxu0 0.0
        %328 = vmatprep.subr.mxu0 0.0
        %329 = vmatpush2.msra.mxu0 0.0
        %330 = vmatprep.subr.mxu0 0.0
        %331 = vmatpush2.msra.mxu0 0.0
        %332 = vmatprep.subr.mxu0 0.0
        %333 = vmatpush2.msra.mxu0 0.0
        %334 = vmatprep.subr.mxu0 0.0
        %335 = vmatpush2.msra.mxu0 0.0
        %336 = vmatprep.subr.mxu0 0.0
        %337 = vmatpush2.msra.mxu0 0.0
        %338 = vmatprep.subr.mxu0 0.0
        %339 = vmatpush2.msra.mxu0 0.0
        %340 = vmatprep.subr.mxu0 0.0
        %341 = vmatpush2.msra.mxu0 0.0
        %342 = vmatprep.subr.mxu0 0.0
        %343 = vmatpush2.msra.mxu0 0.0
        %344 = vmatprep.subr.mxu0 0.0
        %345 = vmatpush2.msra.mxu0 0.0
        %346 = vmatprep.subr.mxu0 0.0
        %347 = vmatpush2.msra.mxu0 0.0
        %348 = vmatprep.mubr.f32.mxu0 0.0
        %349 = vmatmul.mubr.f32.gmra.mxu0 %v279
        %v350 = vpop.f32.mrf.mxu0
        %v351 = vadd.f32 0.0, %v350
        %v352 = vpop.f32.mrf.mxu0
        %v353 = vadd.f32 0.0, %v352
        %354 = vmatprep.mubr.f32.mxu0 0.0
        %355 = vmatmul.mubr.f32.gmra.mxu0 %v282
        %v356 = vpop.f32.mrf.mxu0
        %v357 = vadd.f32 0.0, %v356
        %v358 = vpop.f32.mrf.mxu0
        %v359 = vadd.f32 0.0, %v358
        %360 = vdwg.mxu0
        %vm361 = vcmp.ge.f32.partialorder %v351, 0.0
        %vm362 = vcmp.ge.f32.partialorder %v353, 0.0
        %vm363 = vcmp.ge.f32.partialorder %v357, 0.0
        %vm364 = vcmp.ge.f32.partialorder %v359, 0.0
        %v365 = vstv %s264
        %v366 = vmul.f32 %v365, %v351
        %v367 = vmul.f32 %v365, %v353
        %v368 = vmul.f32 %v365, %v357
        %v369 = vmul.f32 %v365, %v359
        %v370 = vsel %vm361, %v351, %v366
        %v371 = vsel %vm362, %v353, %v367
        %v372 = vsel %vm363, %v357, %v368
        %v373 = vsel %vm364, %v359, %v369
        %v374 = vadd.f32 %v370, %v372
        %375 = vadd.xlane.f32.xlu0 %v374
        %v376 = vpop.xlane.xlu0 %375
        %v377 = vrot.slane %v376, 4
        %v378 = vadd.f32 %v376, %v377
        %v379 = vrot.slane %v378, 2
        %v380 = vadd.f32 %v378, %v379
        %v381 = vrot.slane %v380, 1
        %v382 = vadd.f32 %v380, %v381
        %s383 = vtos %v382
        %s384 = smul.f32 %s383, 0.00048828125
        %v385 = vstv %s384
        %v386 = vsub.f32 %v370, %v385
        %v387 = vsub.f32 %v372, %v385
        %v388 = vmul.f32 %v386, %v386
        %v389 = vmul.f32 %v387, %v387
        %v390 = vadd.f32 %v388, %v389
        %391 = vadd.xlane.f32.xlu0 %v390
        %v392 = vpop.xlane.xlu0 %391
        %v393 = vrot.slane %v392, 4
        %v394 = vadd.f32 %v392, %v393
        %v395 = vrot.slane %v394, 2
        %v396 = vadd.f32 %v394, %v395
        %v397 = vrot.slane %v396, 1
        %v398 = vadd.f32 %v396, %v397
        %s399 = vtos %v398
        %s400 = smul.f32 %s399, 0.00048828125
        %s401 = smax.f32 %s400, 0.0
        %v402 = vadd.f32 %v371, %v373
        %403 = vadd.xlane.f32.xlu0 %v402
        %v404 = vpop.xlane.xlu0 %403
        %v405 = vrot.slane %v404, 4
        %v406 = vadd.f32 %v404, %v405
        %v407 = vrot.slane %v406, 2
        %v408 = vadd.f32 %v406, %v407
        %v409 = vrot.slane %v408, 1
        %v410 = vadd.f32 %v408, %v409
        %s411 = vtos %v410
        %s412 = smul.f32 %s411, 0.00048828125
        %v413 = vstv %s412
        %v414 = vsub.f32 %v371, %v413
        %v415 = vsub.f32 %v373, %v413
        %v416 = vmul.f32 %v414, %v414
        %v417 = vmul.f32 %v415, %v415
        %v418 = vadd.f32 %v416, %v417
        %419 = vadd.xlane.f32.xlu0 %v418
        %v420 = vpop.xlane.xlu0 %419
        %v421 = vrot.slane %v420, 4
        %v422 = vadd.f32 %v420, %v421
        %v423 = vrot.slane %v422, 2
        %v424 = vadd.f32 %v422, %v423
        %v425 = vrot.slane %v424, 1
        %v426 = vadd.f32 %v424, %v425
        %s427 = vtos %v426
        %s428 = smul.f32 %s427, 0.00048828125
        %s429 = smax.f32 %s428, 0.0
        %v430 = vstv %s401
        %v431 = vsel %vm269, %v413, %v385
        %v432 = vsel %vm270, %v413, %v385
        %v433 = vstv %s429
        %v434 = vsel %vm269, %v433, %v430
        %v435 = vsel %vm270, %v433, %v430
        %v436 = vadd.f32 %v434, 1e-08
        %v437 = vadd.f32 %v435, 1e-08
        %v438 = vrsqrt.pop %v436
        %v439 = vrsqrt.pop %v437
        %v440 = vsub.f32 %v370, %v431
        %v441 = vsub.f32 %v371, %v432
        %v442 = vsub.f32 %v372, %v431
        %v443 = vsub.f32 %v373, %v432
        %v444 = vmul.f32 %v440, %v438
        %v445 = vmul.f32 %v441, %v439
        %v446 = vmul.f32 %v442, %v438
        %v447 = vmul.f32 %v443, %v439
        %449 = vset.pattern.permute.xlu0 0
        %450 = vperm.xlu0 %449, %v262
        %v451 = vpop.permute.xlu0 %450
        %454 = vset.pattern.permute.xlu0 0
        %455 = vperm.xlu0 %454, %v263
        %v456 = vpop.permute.xlu0 %455
        %v458 = vmul.f32 %v444, %v451
        %v459 = vmul.f32 %v445, %v451
        %v460 = vmul.f32 %v446, %v456
        %v461 = vmul.f32 %v447, %v456
        %462 = vset.pattern.permute.xlu0 1
        %463 = vperm.xlu0 %462, %v262
        %v464 = vpop.permute.xlu0 %463
        %466 = vset.pattern.permute.xlu0 1
        %467 = vperm.xlu0 %466, %v263
        %v468 = vpop.permute.xlu0 %467
        %v470 = vadd.f32 %v458, %v464
        %v471 = vadd.f32 %v459, %v464
        %v472 = vadd.f32 %v460, %v468
        %v473 = vadd.f32 %v461, %v468
        %vm474 = vcmask 15360
        %475 = vst.msk [vmem:[#allocation2] sm:$0xff] %vm474, 0.0
        %476 = vst.msk [vmem:[#allocation2 + $0x18] sm:$0xff] %vm474, 0.0
        %vm477 = vcmask 31760
        %478 = vst.msk [vmem:[#allocation2 + $0x10] sm:$0xff] %vm477, 0.0
        %479 = vst.msk [vmem:[#allocation2 + $0x28] sm:$0xff] %vm477, 0.0
        %484 = vrot.lane.b32.xlu0 %v470, 2
        %v485 = vpop.permute.xlu0 %484
        %486 = vrot.lane.b32.xlu0 %v471, 2
        %v487 = vpop.permute.xlu0 %486
        %488 = vrot.lane.b32.xlu0 %v472, 2
        %v489 = vpop.permute.xlu0 %488
        %490 = vrot.lane.b32.xlu0 %v473, 2
        %v491 = vpop.permute.xlu0 %490
        %v492 = vsel %vm474, %v485, %v487
        %v493 = vsel %vm474, %v489, %v491
        %vm500 = vcmask 1047568
        %501 = vst.msk [vmem:[#allocation2] sm:$0xff] %vm500, %v485
        %502 = vst [vmem:[#allocation2 + $0x8] sm:$0xff] %v492
        %503 = vst.msk [vmem:[#allocation2 + $0x10] sm:$0xff] %vm474, %v487
        %504 = vst.msk [vmem:[#allocation2 + $0x18] sm:$0xff] %vm500, %v489
        %505 = vst [vmem:[#allocation2 + $0x20] sm:$0xff] %v493
        %506 = vst.msk [vmem:[#allocation2 + $0x28] sm:$0xff] %vm474, %v491
        %v507 = vld [vmem:[#allocation2] sm:$0xff]
        %v508 = vld [vmem:[#allocation2 + $0x8] sm:$0xff]
        %v509 = vld [vmem:[#allocation2 + $0x18] sm:$0xff]
        %v510 = vld [vmem:[#allocation2 + $0x20] sm:$0xff]
        %vm511 = vcmp.ge.s32.totalorder %v275, 2
        %vm512 = vcmp.ge.s32.totalorder %v276, 2
        %v513 = vsel %vm511, 1, 0
        %v514 = vsel %vm512, 1, 0
        %vm515 = vcmp.eq.s32.totalorder %v513, 1
        %vm516 = vcmp.eq.s32.totalorder %v514, 1
        %v517 = vsel %vm515, %v507, 0.0
        %v518 = vsel %vm516, %v508, 0.0
        %v519 = vsel %vm515, %v509, 0.0
        %v520 = vsel %vm516, %v510, 0.0
        %521 = vset.pattern.permute.xlu0 4
        %522 = vperm.xlu0 %521, %v262
        %v523 = vpop.permute.xlu0 %522
        %525 = vset.pattern.permute.xlu0 4
        %526 = vperm.xlu0 %525, %v263
        %v527 = vpop.permute.xlu0 %526
        %v529 = vmul.f32 %v517, %v523
        %v530 = vmul.f32 %v518, %v523
        %v531 = vmul.f32 %v519, %v527
        %v532 = vmul.f32 %v520, %v527
        %533 = vset.pattern.permute.xlu0 5
        %534 = vperm.xlu0 %533, %v262
        %v535 = vpop.permute.xlu0 %534
        %537 = vset.pattern.permute.xlu0 5
        %538 = vperm.xlu0 %537, %v263
        %v539 = vpop.permute.xlu0 %538
        %v541 = vmul.f32 %v470, %v535
        %v542 = vmul.f32 %v471, %v535
        %v543 = vmul.f32 %v472, %v539
        %v544 = vmul.f32 %v473, %v539
        %v545 = vadd.f32 %v529, %v541
        %v546 = vadd.f32 %v530, %v542
        %v547 = vadd.f32 %v531, %v543
        %v548 = vadd.f32 %v532, %v544
        %v549 = vld [vmem:[#allocation2] sm:$0xff]
        %v550 = vld [vmem:[#allocation2 + $0x8] sm:$0xff]
        %v551 = vld [vmem:[#allocation2 + $0x10] sm:$0xff]
        %v552 = vld [vmem:[#allocation2 + $0x18] sm:$0xff]
        %v553 = vld [vmem:[#allocation2 + $0x20] sm:$0xff]
        %v554 = vld [vmem:[#allocation2 + $0x28] sm:$0xff]
        %vm555 = vcmp.lt.s32.totalorder %v275, 126
        %vm556 = vcmp.lt.s32.totalorder %v276, 126
        %v557 = vsel %vm555, 1, 0
        %v558 = vsel %vm556, 1, 0
        %vm559 = vcmp.eq.s32.totalorder %v557, 1
        %vm560 = vcmp.eq.s32.totalorder %v558, 1
        %567 = vrot.lane.b32.xlu0 %v549, 124
        %v568 = vpop.permute.xlu0 %567
        %569 = vrot.lane.b32.xlu0 %v550, 124
        %v570 = vpop.permute.xlu0 %569
        %571 = vrot.lane.b32.xlu0 %v551, 124
        %v572 = vpop.permute.xlu0 %571
        %573 = vrot.lane.b32.xlu0 %v552, 124
        %v574 = vpop.permute.xlu0 %573
        %575 = vrot.lane.b32.xlu0 %v553, 124
        %v576 = vpop.permute.xlu0 %575
        %577 = vrot.lane.b32.xlu0 %v554, 124
        %v578 = vpop.permute.xlu0 %577
        %vm579 = vcmask 1014784
        %v580 = vsel %vm579, %v568, %v570
        %v581 = vsel %vm579, %v570, %v572
        %v582 = vsel %vm579, %v574, %v576
        %v583 = vsel %vm579, %v576, %v578
        %v588 = vsel %vm559, %v580, 0.0
        %v589 = vsel %vm560, %v581, 0.0
        %v590 = vsel %vm559, %v582, 0.0
        %v591 = vsel %vm560, %v583, 0.0
        %592 = vset.pattern.permute.xlu0 6
        %593 = vperm.xlu0 %592, %v262
        %v594 = vpop.permute.xlu0 %593
        %596 = vset.pattern.permute.xlu0 6
        %597 = vperm.xlu0 %596, %v263
        %v598 = vpop.permute.xlu0 %597
        %v600 = vmul.f32 %v588, %v594
        %v601 = vmul.f32 %v589, %v594
        %v602 = vmul.f32 %v590, %v598
        %v603 = vmul.f32 %v591, %v598
        %v604 = vadd.f32 %v545, %v600
        %v605 = vadd.f32 %v546, %v601
        %v606 = vadd.f32 %v547, %v602
        %v607 = vadd.f32 %v548, %v603
        %vm608 = vcmp.ge.f32.partialorder %v604, 0.0
        %vm609 = vcmp.ge.f32.partialorder %v605, 0.0
        %vm610 = vcmp.ge.f32.partialorder %v606, 0.0
        %vm611 = vcmp.ge.f32.partialorder %v607, 0.0
        %v612 = vstv %s265
        %v613 = vmul.f32 %v612, %v604
        %v614 = vmul.f32 %v612, %v605
        %v615 = vmul.f32 %v612, %v606
        %v616 = vmul.f32 %v612, %v607
        %v617 = vsel %vm608, %v604, %v613
        %v618 = vsel %vm609, %v605, %v614
        %v619 = vsel %vm610, %v606, %v615
        %v620 = vsel %vm611, %v607, %v616
        %v621 = vadd.f32 %v617, %v619
        %622 = vadd.xlane.f32.xlu0 %v621
        %v623 = vpop.xlane.xlu0 %622
        %v624 = vrot.slane %v623, 4
        %v625 = vadd.f32 %v623, %v624
        %v626 = vrot.slane %v625, 2
        %v627 = vadd.f32 %v625, %v626
        %v628 = vrot.slane %v627, 1
        %v629 = vadd.f32 %v627, %v628
        %s630 = vtos %v629
        %s631 = smul.f32 %s630, 0.00048828125
        %v632 = vstv %s631
        %v633 = vsub.f32 %v617, %v632
        %v634 = vsub.f32 %v619, %v632
        %v635 = vmul.f32 %v633, %v633
        %v636 = vmul.f32 %v634, %v634
        %v637 = vadd.f32 %v635, %v636
        %638 = vadd.xlane.f32.xlu0 %v637
        %v639 = vpop.xlane.xlu0 %638
        %v640 = vrot.slane %v639, 4
        %v641 = vadd.f32 %v639, %v640
        %v642 = vrot.slane %v641, 2
        %v643 = vadd.f32 %v641, %v642
        %v644 = vrot.slane %v643, 1
        %v645 = vadd.f32 %v643, %v644
        %s646 = vtos %v645
        %s647 = smul.f32 %s646, 0.00048828125
        %s648 = smax.f32 %s647, 0.0
        %v649 = vadd.f32 %v618, %v620
        %650 = vadd.xlane.f32.xlu0 %v649
        %v651 = vpop.xlane.xlu0 %650
        %v652 = vrot.slane %v651, 4
        %v653 = vadd.f32 %v651, %v652
        %v654 = vrot.slane %v653, 2
        %v655 = vadd.f32 %v653, %v654
        %v656 = vrot.slane %v655, 1
        %v657 = vadd.f32 %v655, %v656
        %s658 = vtos %v657
        %s659 = smul.f32 %s658, 0.00048828125
        %v660 = vstv %s659
        %v661 = vsub.f32 %v618, %v660
        %v662 = vsub.f32 %v620, %v660
        %v663 = vmul.f32 %v661, %v661
        %v664 = vmul.f32 %v662, %v662
        %v665 = vadd.f32 %v663, %v664
        %666 = vadd.xlane.f32.xlu0 %v665
        %v667 = vpop.xlane.xlu0 %666
        %v668 = vrot.slane %v667, 4
        %v669 = vadd.f32 %v667, %v668
        %v670 = vrot.slane %v669, 2
        %v671 = vadd.f32 %v669, %v670
        %v672 = vrot.slane %v671, 1
        %v673 = vadd.f32 %v671, %v672
        %s674 = vtos %v673
        %s675 = smul.f32 %s674, 0.00048828125
        %s676 = smax.f32 %s675, 0.0
        %v677 = vstv %s648
        %v678 = vsel %vm269, %v660, %v632
        %v679 = vsel %vm270, %v660, %v632
        %v680 = vstv %s676
        %v681 = vsel %vm269, %v680, %v677
        %v682 = vsel %vm270, %v680, %v677
        %v683 = vadd.f32 %v681, 1e-08
        %v684 = vadd.f32 %v682, 1e-08
        %v685 = vrsqrt.pop %v683
        %v686 = vrsqrt.pop %v684
        %v687 = vsub.f32 %v617, %v678
        %v688 = vsub.f32 %v618, %v679
        %v689 = vsub.f32 %v619, %v678
        %v690 = vsub.f32 %v620, %v679
        %v691 = vmul.f32 %v687, %v685
        %v692 = vmul.f32 %v688, %v686
        %v693 = vmul.f32 %v689, %v685
        %v694 = vmul.f32 %v690, %v686
        %695 = vset.pattern.permute.xlu0 2
        %696 = vperm.xlu0 %695, %v262
        %v697 = vpop.permute.xlu0 %696
        %699 = vset.pattern.permute.xlu0 2
        %700 = vperm.xlu0 %699, %v263
        %v701 = vpop.permute.xlu0 %700
        %v703 = vmul.f32 %v691, %v697
        %v704 = vmul.f32 %v692, %v697
        %v705 = vmul.f32 %v693, %v701
        %v706 = vmul.f32 %v694, %v701
        %707 = vset.pattern.permute.xlu0 3
        %708 = vperm.xlu0 %707, %v262
        %v709 = vpop.permute.xlu0 %708
        %711 = vset.pattern.permute.xlu0 3
        %712 = vperm.xlu0 %711, %v263
        %v713 = vpop.permute.xlu0 %712
        %v715 = vadd.f32 %v703, %v709
        %v716 = vadd.f32 %v704, %v709
        %v717 = vadd.f32 %v705, %v713
        %v718 = vadd.f32 %v706, %v713
        %vm719 = vcmask 130048
        %v721 = vsel %vm719, %v261, 0
        %723 = vmatprep.subr.mxu0 0.0
        %724 = vmatpush1.msra.mxu0 0.0
        %725 = vmatprep.subr.mxu0 0.0
        %726 = vmatpush1.msra.mxu0 0.0
        %727 = vmatprep.subr.mxu0 0.0
        %728 = vmatpush1.msra.mxu0 0.0
        %729 = vmatprep.subr.mxu0 0.0
        %730 = vmatpush1.msra.mxu0 0.0
        %731 = vmatprep.subr.mxu0 0.0
        %732 = vmatpush1.msra.mxu0 0.0
        %733 = vmatprep.subr.mxu0 0.0
        %734 = vmatpush1.msra.mxu0 0.0
        %735 = vmatprep.subr.mxu0 0.0
        %736 = vmatpush1.msra.mxu0 0.0
        %737 = vmatprep.subr.mxu0 0.0
        %738 = vmatpush1.msra.mxu0 0.0
        %739 = vmatprep.subr.mxu0 0.0
        %740 = vmatpush1.msra.mxu0 0.0
        %741 = vmatprep.subr.mxu0 0.0
        %742 = vmatpush1.msra.mxu0 0.0
        %743 = vmatprep.subr.mxu0 0.0
        %744 = vmatpush1.msra.mxu0 0.0
        %745 = vmatprep.subr.mxu0 0.0
        %746 = vmatpush1.msra.mxu0 0.0
        %747 = vmatprep.subr.mxu0 0.0
        %748 = vmatpush1.msra.mxu0 0.0
        %749 = vmatprep.subr.mxu0 0.0
        %750 = vmatpush1.msra.mxu0 0.0
        %751 = vmatprep.subr.mxu0 %v718
        %752 = vmatpush1.msra.mxu0 %v717
        %753 = vmatprep.subr.mxu0 %v716
        %754 = vmatpush1.msra.mxu0 %v715
        %755 = vmatprep.subr.mxu0 0.0
        %756 = vmatpush2.msra.mxu0 0.0
        %757 = vmatprep.subr.mxu0 0.0
        %758 = vmatpush2.msra.mxu0 0.0
        %759 = vmatprep.subr.mxu0 0.0
        %760 = vmatpush2.msra.mxu0 0.0
        %761 = vmatprep.subr.mxu0 0.0
        %762 = vmatpush2.msra.mxu0 0.0
        %763 = vmatprep.subr.mxu0 0.0
        %764 = vmatpush2.msra.mxu0 0.0
        %765 = vmatprep.subr.mxu0 0.0
        %766 = vmatpush2.msra.mxu0 0.0
        %767 = vmatprep.subr.mxu0 0.0
        %768 = vmatpush2.msra.mxu0 0.0
        %769 = vmatprep.subr.mxu0 0.0
        %770 = vmatpush2.msra.mxu0 0.0
        %771 = vmatprep.subr.mxu0 0.0
        %772 = vmatpush2.msra.mxu0 0.0
        %773 = vmatprep.subr.mxu0 0.0
        %774 = vmatpush2.msra.mxu0 0.0
        %775 = vmatprep.subr.mxu0 0.0
        %776 = vmatpush2.msra.mxu0 0.0
        %777 = vmatprep.subr.mxu0 0.0
        %778 = vmatpush2.msra.mxu0 0.0
        %779 = vmatprep.subr.mxu0 0.0
        %780 = vmatpush2.msra.mxu0 0.0
        %781 = vmatprep.subr.mxu0 0.0
        %782 = vmatpush2.msra.mxu0 0.0
        %783 = vmatprep.subr.mxu0 0.0
        %784 = vmatpush2.msra.mxu0 0.0
        %785 = vmatprep.subr.mxu0 0.0
        %786 = vmatpush2.msra.mxu0 0.0
        %787 = vmatprep.mubr.f32.mxu0 0.0
        %788 = vmatmul.mubr.f32.gmra.mxu0 %v721
        %v789 = vpop.f32.mrf.mxu0
        %v790 = vadd.f32 %v257, %v789
        %v791 = vpop.f32.mrf.mxu0
        %v792 = vadd.f32 %v258, %v791
        %793 = vdwg.mxu0
        %794 = vst [vmem:[%s254] sm:$0xff] %v790
        %795 = vst [vmem:[%s254 + $0x8] sm:$0xff] %v792
        %s796 = sand.u32 %s141, 1
        %s797 = scalar_lea.sflag [#allocation5], %s796
        %s798 = sand.u32 %s141, 1
        %s799 = smul.addr %s798, 16
        %s800 = scalar_lea.vmem [#allocation8], %s799
        // Predicated region
        $region49: #{tpu_custom_call.1} parent=39 // pred_check
          %p801 = pneg %p151
        $region50: #{tpu_custom_call.1} parent=39 // pred_check_branch
          %803 = sbr.rel (%p801) target = $region52
        $region51: #{tpu_custom_call.1} parent=39 // pred_region
          %s804 = smul.u32 2, %s23
          %s806 = ssub.s32 256, 256
          %807 = vsyncadd %s797, %s806
          %s808 = smul.addr %s804, 128
          %s809 = scalar_lea.hbm %s5, %s808
          %s811 = sshll.u32 %s800, 4
          %s812 = int_to_ptr.vmem [resolvable:$true] %s811
          %814 = dma.vmem_to_hbm [thread:$0]  %s812, 256, %s809, %s797
        $region52: #{tpu_custom_call.1} parent=39 // pred_fallthru
          _
      $region40: #{tpu_custom_call.1} parent=5 // pred_fallthru
        _
      %p815 = scmp.le.s32.totalorder 2, %s18
      // Predicated region
      $region53: #{tpu_custom_call.1} parent=5 // pred_check
        %p816 = pneg %p815
      $region54: #{tpu_custom_call.1} parent=5 // pred_check_branch
        %818 = sbr.rel (%p816) target = $region56
      $region55: #{tpu_custom_call.1} parent=5 // pred_region
        %s819 = ssub.s32 %s18, 2
        // Predicated region
        $region57: #{tpu_custom_call.1} parent=55 // pred_check
          %p820 = pneg %p157
        $region58: #{tpu_custom_call.1} parent=55 // pred_check_branch
          %822 = sbr.rel (%p820) target = $region60
        $region59: #{tpu_custom_call.1} parent=55 // pred_region
          %s823 = sand.u32 %s142, 1
          %s824 = scalar_lea.sflag [#allocation5], %s823
          %s825 = sand.u32 %s142, 1
          %s826 = smul.addr %s825, 16
          %s827 = scalar_lea.vmem [#allocation8], %s826
          %828 = dma.done %s824, 256
        $region60: #{tpu_custom_call.1} parent=55 // pred_fallthru
          _
      $region56: #{tpu_custom_call.1} parent=5 // pred_fallthru
        _
    $region6: #{tpu_custom_call.1} parent=1 // loop_footer
      %s22 = sadd.s32 1, %s18
    $region7: #{tpu_custom_call.1} parent=1 // loop_footer_branch
      %17 = sbr.rel target = $region3
    $region8: #{tpu_custom_call.1} parent=1 // loop_exit
      _
    %829 = vsyncpa [#allocation4], 1
    %s830 = scalar_lea.sflag [#allocation4], 1
    %831 = vsyncpa %s830, 1
    %832 = vsyncpa [#allocation5], 1
    %s833 = scalar_lea.sflag [#allocation5], 1
    %834 = vsyncpa %s833, 1
    %835 = vsyncpa [#allocation6], 1
    %s836 = scalar_lea.sflag [#allocation6], 1
    %837 = vsyncpa %s836, 1

</llo_original>
